<compile_context>
chip_gen: v5e
topology: v5e:2x2
jax: 0.10.0
libtpu: 0.0.40
codegen_flags: <defaults>
</compile_context>

<pallas_src>
import functools
import math

import jax
import jax.numpy as jnp
from jax.experimental import pallas as pl
from jax.experimental.pallas import tpu as pltpu

LN_EPS = 1e-6


# ----------------------------------------------------------------------------
# VMEM budgeting / tiling helpers
# ----------------------------------------------------------------------------
def _round_up(x, m):
    return ((x + m - 1) // m) * m


def _vmem_budgets():
    """(per-step tile budget bytes, Mosaic scoped-VMEM limit bytes), gen-aware."""
    vmem_cap = 64 * 1024 * 1024
    try:
        info = pltpu.get_tpu_info()
        vmem_cap = int(getattr(info, "vmem_capacity_bytes", vmem_cap))
    except Exception:
        pass
    if vmem_cap >= 96 * 1024 * 1024:
        # v5e / v6e: 128 MiB physical VMEM -> use it.
        return 32 * 1024 * 1024, 64 * 1024 * 1024
    # v7x (64 MiB physical) or unknown: stay well under the physical limit.
    return 16 * 1024 * 1024, 40 * 1024 * 1024


def _pick_tile(total, bytes_per_unit, align, cap, budget):
    """Largest tile (multiple of `align`, <= cap and VMEM budget) for `total`.

    Prefers a tile that divides `total` exactly (no ragged block) as long as it
    stays within ~2x of the cap; otherwise returns the capped tile and relies
    on the ragged last block (safe here: LayerNorm is row-independent and
    idempotent, so recomputed/rewritten boundary rows are harmless).
    """
    budget_cap = max(align, budget // max(1, bytes_per_unit))
    cap = max(align, min(cap, budget_cap))
    if total <= cap:
        return total                       # one block == full extent
    t = (cap // align) * align
    ragged_fallback = t
    lo = max(align, ((cap // 2) // align) * align)
    while t >= lo:
        if total % t == 0:
            return t
        t -= align
    return ragged_fallback


# ----------------------------------------------------------------------------
# Kernels
# ----------------------------------------------------------------------------
def _ln_channels_last_kernel(x_ref, r_ref, g_ref, b_ref, o_ref, *, eps):
    """LayerNorm over channel segments of a lane-dense (rows, k*C) slab.

    r_ref is either a (C, 1) column of 1/C (plain layout, per-row mean) or a
    (k*C, k*C) block-diagonal matrix of 1/C (k original rows packed per slab
    row).  Both the reduction and its broadcast back ride the MXU, keeping the
    XLU / vector-extended slots free and the kernel HBM-bound.
    """
    x = x_ref[...].astype(jnp.float32)                        # (tm, k*C)
    r = r_ref[...]
    mu = jnp.dot(x, r, preferred_element_type=jnp.float32)    # per-(segment)row mean
    xc = x - mu
    var = jnp.dot(xc * xc, r, preferred_element_type=jnp.float32)
    inv = jax.lax.rsqrt(var + eps)
    y = xc * inv * g_ref[...].astype(jnp.float32) + b_ref[...].astype(jnp.float32)
    o_ref[...] = y.astype(o_ref.dtype)


def _ln_channels_first_kernel(x_ref, g_ref, b_ref, o_ref, *, eps):
    """LayerNorm over the channel (sublane) axis of a (nb, C, spatial) slab."""
    x = x_ref[...].astype(jnp.float32)                        # (nb, C, ts)
    mu = jnp.mean(x, axis=1, keepdims=True)                   # (nb, 1, ts)
    xc = x - mu
    var = jnp.mean(xc * xc, axis=1, keepdims=True)
    inv = jax.lax.rsqrt(var + eps)
    y = xc * inv * g_ref[...].astype(jnp.float32) + b_ref[...].astype(jnp.float32)
    o_ref[...] = y.astype(o_ref.dtype)


# ----------------------------------------------------------------------------
# Wrappers
# ----------------------------------------------------------------------------
def layer_norm_channels_last(x, weight, bias, eps=LN_EPS):
    """F.layer_norm over the last dim. x: (..., C)."""
    orig_shape = x.shape
    C = orig_shape[-1]
    M = int(math.prod(orig_shape[:-1])) if len(orig_shape) > 1 else 1
    tile_budget, vmem_limit = _vmem_budgets()

    # Lane packing: fold k consecutive rows into one lane-dense row of k*C so
    # vregs are full and stores are unmasked (free contiguous reshape).
    k = 1
    if C % 128 != 0:
        k_cand = 128 // math.gcd(C, 128)        # smallest k with (k*C) % 128 == 0
        if k_cand * C <= 512 and M % k_cand == 0:
            k = k_cand
    kc = k * C
    Mp = M // k
    x2 = x.reshape(Mp, kc)

    if k == 1:
        red = jnp.full((C, 1), 1.0 / C, dtype=jnp.float32)
        red_spec = pl.BlockSpec((C, 1), lambda i: (0, 0))
        g2 = weight.reshape(1, C)
        b2 = bias.reshape(1, C)
    else:
        seg = jnp.arange(kc, dtype=jnp.int32) // C
        red = (seg[:, None] == seg[None, :]).astype(jnp.float32) * (1.0 / C)
        red_spec = pl.BlockSpec((kc, kc), lambda i: (0, 0))
        g2 = jnp.tile(weight.reshape(1, C), (1, k))
        b2 = jnp.tile(bias.reshape(1, C), (1, k))

    itemsize = jnp.dtype(x.dtype).itemsize
    align = max(8, 32 // itemsize)              # sublane packing per dtype
    kc_pad = _round_up(kc, 128)
    # in + out (double buffered) + ~5 f32 compiler temporaries per row.
    bytes_per_row = kc_pad * (4 * itemsize + 5 * 4)
    row_budget = max(0, tile_budget - 2 * int(red.size) * 4)

    # Keep >= 2 grid steps so both v7x TensorCores get work (cheap on v5e/v6e).
    if Mp > 2 * align:
        cap = min(8192, _round_up(pl.cdiv(Mp, 2), align))
    else:
        cap = 8192
    tm = _pick_tile(Mp, bytes_per_row, align, cap, row_budget)
    grid = (pl.cdiv(Mp, tm),)

    out = pl.pallas_call(
        functools.partial(_ln_channels_last_kernel, eps=eps),
        out_shape=jax.ShapeDtypeStruct((Mp, kc), x.dtype),
        grid=grid,
        in_specs=[
            pl.BlockSpec((tm, kc), lambda i: (i, 0)),
            red_spec,
            pl.BlockSpec((1, kc), lambda i: (0, 0)),
            pl.BlockSpec((1, kc), lambda i: (0, 0)),
        ],
        out_specs=pl.BlockSpec((tm, kc), lambda i: (i, 0)),
        compiler_params=pltpu.CompilerParams(
            dimension_semantics=("parallel",),
            vmem_limit_bytes=vmem_limit,
        ),
    )(x2, red, g2, b2)
    return out.reshape(orig_shape)


def layer_norm_channels_first(x, weight, bias, eps=LN_EPS):
    """ConvNeXt channels_first LayerNorm. x: (N, C, *spatial), normalize over C."""
    orig_shape = x.shape
    N, C = orig_shape[0], orig_shape[1]
    S = int(math.prod(orig_shape[2:])) if len(orig_shape) > 2 else 1
    x3 = x.reshape(N, C, S)
    tile_budget, vmem_limit = _vmem_budgets()

    itemsize = jnp.dtype(x.dtype).itemsize
    # Per lane-column of one image: C sublanes of in+out (double-buffered) plus
    # ~5 f32 compiler temporaries.
    bytes_per_lane = C * (4 * itemsize + 5 * 4)
    ts = _pick_tile(S, bytes_per_lane, 128, 8192, tile_budget)

    # Batch several images per grid step when the spatial block is small.
    img_block_bytes = max(1, _round_up(ts, 128) * bytes_per_lane)
    nb = max(1, min(N, tile_budget // img_block_bytes))
    nb0 = nb
    while nb > 1 and N % nb != 0:               # prefer an exact divisor of N
        nb -= 1
    if nb * 2 <= nb0:                           # ...unless it costs >2x steps
        nb = nb0                                # (ragged last block is safe)
    if pl.cdiv(N, nb) * pl.cdiv(S, ts) < 2:     # keep both v7x TensorCores busy
        if N > 1:
            nb = (N + 1) // 2
        elif ts > 256:
            ts = _round_up(pl.cdiv(S, 2), 128)
    grid = (pl.cdiv(N, nb), pl.cdiv(S, ts))

    out = pl.pallas_call(
        functools.partial(_ln_channels_first_kernel, eps=eps),
        out_shape=jax.ShapeDtypeStruct((N, C, S), x.dtype),
        grid=grid,
        in_specs=[
            pl.BlockSpec((nb, C, ts), lambda n, s: (n, 0, s)),
            pl.BlockSpec((1, C, 1), lambda n, s: (0, 0, 0)),
            pl.BlockSpec((1, C, 1), lambda n, s: (0, 0, 0)),
        ],
        out_specs=pl.BlockSpec((nb, C, ts), lambda n, s: (n, 0, s)),
        compiler_params=pltpu.CompilerParams(
            dimension_semantics=("parallel", "parallel"),
            vmem_limit_bytes=vmem_limit,
        ),
    )(x3, weight.reshape(1, C, 1), bias.reshape(1, C, 1))
    return out.reshape(orig_shape)


def layer_norm(x, weight, bias, eps=LN_EPS, data_format="channels_last"):
    """Forward of the PyTorch LayerNorm module (both data formats)."""
    if data_format == "channels_last":
        return layer_norm_channels_last(x, weight, bias, eps)
    elif data_format == "channels_first":
        return layer_norm_channels_first(x, weight, bias, eps)
    raise NotImplementedError(data_format)


# ----------------------------------------------------------------------------
# Pure-JAX references (for correctness checks only)
# ----------------------------------------------------------------------------
def _ref_channels_last(x, w, b, eps):
    x = x.astype(jnp.float32)
    mu = jnp.mean(x, axis=-1, keepdims=True)
    var = jnp.mean((x - mu) ** 2, axis=-1, keepdims=True)
    return (x - mu) / jnp.sqrt(var + eps) * w + b


def _ref_channels_first(x, w, b, eps):
    x = x.astype(jnp.float32)
    mu = jnp.mean(x, axis=1, keepdims=True)
    var = jnp.mean((x - mu) ** 2, axis=1, keepdims=True)
    xn = (x - mu) / jnp.sqrt(var + eps)
    return w[None, :, None, None] * xn + b[None, :, None, None]


# ----------------------------------------------------------------------------
# Demo / self-test
# ----------------------------------------------------------------------------
if __name__ == "__main__":
    key = jax.random.PRNGKey(0)
    k_x, k_w, k_b, k_x2, k_w2, k_b2 = jax.random.split(key, 6)

    # channels_last, C=32 (exercises the lane-packed block-diagonal MXU path).
    C = 32
    x_cl = jax.random.normal(k_x, (2, 16, 16, C), dtype=jnp.float32)
    weight = 1.0 + 0.1 * jax.random.normal(k_w, (C,), dtype=jnp.float32)
    bias = 0.1 * jax.random.normal(k_b, (C,), dtype=jnp.float32)

    y_cl = layer_norm(x_cl, weight, bias, eps=LN_EPS, data_format="channels_last")
    y_cl = jax.block_until_ready(y_cl)
    ref_cl = _ref_channels_last(x_cl, weight, bias, LN_EPS)
    assert y_cl.shape == x_cl.shape
    assert jnp.all(jnp.isfinite(y_cl))
    assert jnp.allclose(y_cl, ref_cl, atol=1e-5, rtol=1e-5), "channels_last (packed) mismatch"

    # channels_last, C=128 (exercises the lane-dense ones-column MXU path).
    C2 = 128
    x_cl2 = jax.random.normal(k_x2, (4, 8, C2), dtype=jnp.float32)
    w2 = 1.0 + 0.1 * jax.random.normal(k_w2, (C2,), dtype=jnp.float32)
    b2 = 0.1 * jax.random.normal(k_b2, (C2,), dtype=jnp.float32)
    y_cl2 = jax.block_until_ready(
        layer_norm(x_cl2, w2, b2, eps=LN_EPS, data_format="channels_last"))
    ref_cl2 = _ref_channels_last(x_cl2, w2, b2, LN_EPS)
    assert jnp.allclose(y_cl2, ref_cl2, atol=1e-5, rtol=1e-5), "channels_last (dense) mismatch"

    # channels_first: (batch=2, C=32, H=16, W=16).
    x_cf = jnp.transpose(x_cl, (0, 3, 1, 2))
    y_cf = layer_norm(x_cf, weight, bias, eps=LN_EPS, data_format="channels_first")
    y_cf = jax.block_until_ready(y_cf)
    ref_cf = _ref_channels_first(x_cf, weight, bias, LN_EPS)
    assert y_cf.shape == x_cf.shape
    assert jnp.all(jnp.isfinite(y_cf))
    assert jnp.allclose(y_cf, ref_cf, atol=1e-5, rtol=1e-5), "channels_first mismatch"

    print("KERNEL_OK")
</pallas_src>

<mosaic_0001>
module attributes {stable_mosaic.version = 11 : i64} {
  func.func @_ln_channels_last_kernel(%arg0: i32, %arg1: memref<64x128xf32, #tpu.memory_space<vmem>>, %arg2: memref<128x128xf32, #tpu.memory_space<vmem>>, %arg3: memref<1x128xf32, #tpu.memory_space<vmem>>, %arg4: memref<1x128xf32, #tpu.memory_space<vmem>>, %arg5: memref<64x128xf32, #tpu.memory_space<vmem>>) attributes {dimension_semantics = [#tpu.dimension_semantics<parallel>], iteration_bounds = array<i64: 2>, scalar_prefetch = 0 : i64, scratch_operands = 0 : i64, tpu.core_type = #tpu.core_type<tc>, window_params = [{transform_indices = @transform_0, window_bounds = array<i64: 64, 128>}, {pipeline_mode = #tpu.pipeline_mode<synchronous>, transform_indices = @transform_1, window_bounds = array<i64: 128, 128>}, {pipeline_mode = #tpu.pipeline_mode<synchronous>, transform_indices = @transform_2, window_bounds = array<i64: 1, 128>}, {pipeline_mode = #tpu.pipeline_mode<synchronous>, transform_indices = @transform_3, window_bounds = array<i64: 1, 128>}, {transform_indices = @transform_4, window_bounds = array<i64: 64, 128>}]} {
    %c0 = arith.constant 0 : index
    %c0_0 = arith.constant 0 : index
    %0 = vector.load %arg1[%c0, %c0_0] : memref<64x128xf32, #tpu.memory_space<vmem>>, vector<64x128xf32>
    %c0_1 = arith.constant 0 : index
    %c0_2 = arith.constant 0 : index
    %1 = vector.load %arg2[%c0_1, %c0_2] : memref<128x128xf32, #tpu.memory_space<vmem>>, vector<128x128xf32>
    %cst = arith.constant dense<0.000000e+00> : vector<64x128xf32>
    %2 = tpu.matmul %0, %1, %cst {dimension_numbers = #tpu.dot_dimension_numbers<[1], [0], [0], [1], [0, 0, 1, 1], [], []>} : vector<64x128xf32>, vector<128x128xf32>, vector<64x128xf32> -> vector<64x128xf32>
    %3 = arith.subf %0, %2 : vector<64x128xf32>
    %4 = arith.mulf %3, %3 : vector<64x128xf32>
    %cst_3 = arith.constant dense<0.000000e+00> : vector<64x128xf32>
    %5 = tpu.matmul %4, %1, %cst_3 {dimension_numbers = #tpu.dot_dimension_numbers<[1], [0], [0], [1], [0, 0, 1, 1], [], []>} : vector<64x128xf32>, vector<128x128xf32>, vector<64x128xf32> -> vector<64x128xf32>
    %cst_4 = arith.constant 9.99999997E-7 : f32
    %6 = vector.broadcast %cst_4 : f32 to vector<64x128xf32>
    %7 = arith.addf %5, %6 : vector<64x128xf32>
    %8 = math.rsqrt %7 : vector<64x128xf32>
    %9 = arith.mulf %3, %8 : vector<64x128xf32>
    %c0_5 = arith.constant 0 : index
    %c0_6 = arith.constant 0 : index
    %10 = vector.load %arg3[%c0_5, %c0_6] : memref<1x128xf32, #tpu.memory_space<vmem>>, vector<1x128xf32>
    %11 = vector.broadcast %10 : vector<1x128xf32> to vector<64x128xf32>
    %12 = arith.mulf %9, %11 : vector<64x128xf32>
    %c0_7 = arith.constant 0 : index
    %c0_8 = arith.constant 0 : index
    %13 = vector.load %arg4[%c0_7, %c0_8] : memref<1x128xf32, #tpu.memory_space<vmem>>, vector<1x128xf32>
    %14 = vector.broadcast %13 : vector<1x128xf32> to vector<64x128xf32>
    %15 = arith.addf %12, %14 : vector<64x128xf32>
    %c0_9 = arith.constant 0 : index
    %c0_10 = arith.constant 0 : index
    %16 = vector.load %arg5[%c0_9, %c0_10] : memref<64x128xf32, #tpu.memory_space<vmem>>, vector<64x128xf32>
    tpu.vector_store %arg5[%c0_9, %c0_10], %15 {strides = array<i32>} : memref<64x128xf32, #tpu.memory_space<vmem>>, vector<64x128xf32>,
    return
  }
  func.func @transform_0(%arg0: i32) -> (i32, i32) {
    %c0_i32 = arith.constant 0 : i32
    %c0_i32_0 = arith.constant 0 : i32
    return %arg0, %c0_i32 : i32, i32
  }
  func.func @transform_1(%arg0: i32) -> (i32, i32) {
    %c0_i32 = arith.constant 0 : i32
    %c0_i32_0 = arith.constant 0 : i32
    %c0_i32_1 = arith.constant 0 : i32
    return %c0_i32, %c0_i32_0 : i32, i32
  }
  func.func @transform_2(%arg0: i32) -> (i32, i32) {
    %c0_i32 = arith.constant 0 : i32
    %c0_i32_0 = arith.constant 0 : i32
    %c0_i32_1 = arith.constant 0 : i32
    return %c0_i32, %c0_i32_0 : i32, i32
  }
  func.func @transform_3(%arg0: i32) -> (i32, i32) {
    %c0_i32 = arith.constant 0 : i32
    %c0_i32_0 = arith.constant 0 : i32
    %c0_i32_1 = arith.constant 0 : i32
    return %c0_i32, %c0_i32_0 : i32, i32
  }
  func.func @transform_4(%arg0: i32) -> (i32, i32) {
    %c0_i32 = arith.constant 0 : i32
    %c0_i32_0 = arith.constant 0 : i32
    return %arg0, %c0_i32 : i32, i32
  }
}

</mosaic_0001>

<llo_original>
// kernel: tpu_custom_call.1
$region0: #{tpu_custom_call.1}
  #allocation0 [shape = 'u32[]', space=smem, size = 0x4, offset = 0x4, fixed_abs, tag = 'smem constant byte address 0x4 - core index']
  #allocation1 [shape = 'u32[72,128]{1,0:T(1,128)}', space=vmem, size = 0x9000, scoped, tag = 'internal scratch']
  %s0 = inlined_call_operand.hbm [shape: f32[128,128], index: 0, kind: input, shape index: {}]
  %s1 = inlined_call_operand.hbm [shape: f32[128,128], index: 1, kind: input, shape index: {}]
  %s2 = inlined_call_operand.vmem [shape: f32[1,128], index: 2, kind: input, shape index: {}]
  %s3 = inlined_call_operand.vmem [shape: f32[1,128], index: 3, kind: input, shape index: {}]
  %s4 = inlined_call_operand.hbm [shape: f32[128,128], index: 4, kind: output, shape index: {}]
  %s5 = sld [smem:[#allocation0]]
  $region57: #{tpu_custom_call.1} parent=0
    _
  %s7 = ssub.s32 1, %s5
  %s8 = scalar_select 0, %s7, %s5
  $region1: #{tpu_custom_call.1} parent=0
    #allocation2 [shape = 'u8[65536]{0}', space=vmem, size = 0x10000, scoped, tag = 'input window, operand 0']
    #allocation3 [shape = 's32[2]{0}', space=sflag, size = 0x8, scoped, tag = 'scoped memory for tpu_custom_call.1']
    #allocation4 [shape = 's32[2]{0}', space=sflag, size = 0x8, scoped, tag = 'scoped memory for tpu_custom_call.1']
    #allocation5 [shape = 'u8[65536]{0}', space=vmem, size = 0x10000, scoped, tag = 'input window, operand 1, single buffered']
    #allocation6 [shape = 's32[1]{0}', space=sflag, size = 0x4, scoped, tag = 'scoped memory for tpu_custom_call.1']
    #allocation7 [shape = 'u8[65536]{0}', space=vmem, size = 0x10000, scoped, tag = 'output window, operand 0']
    %9 = vsyncpa [#allocation3], 0
    %s10 = scalar_lea.sflag [#allocation3], 1
    %11 = vsyncpa %s10, 0
    %12 = vsyncpa [#allocation6], 0
    %13 = vsyncpa [#allocation4], 0
    %s14 = scalar_lea.sflag [#allocation4], 1
    %15 = vsyncpa %s14, 0
    loop: start=0, step=1, limit=4
    $region2: #{tpu_custom_call.1} parent=1 // loop_pre_header
      _
    $region3: #{tpu_custom_call.1} parent=1 // loop_header
      %s17 = sphi 0, %s21
      %p18 = scmp.ge.s32.totalorder %s17, 4
      %s27 = sphi 0, %s29
      %s30 = sphi 0, %s27
      %s31 = sphi 0, %s30
      %s47 = sphi 0, %s31
      %s51 = sphi 0, %s51
      %s53 = sphi 0, %s51
      %s54 = sphi 0, %s53
      %s68 = sphi 0, %s54
      %s72 = sphi 0, %s72
      %s74 = sphi 0, %s72
      %s75 = sphi 0, %s74
      %s89 = sphi 0, %s75
      %s93 = sphi 0, %s93
      %s95 = sphi 0, %s93
      %s96 = sphi 0, %s95
      %s110 = sphi 0, %s96
      %s116 = sphi 0, %s118
      %s119 = sphi 0, %s116
      %s120 = sphi 0, %s119
      %s136 = sphi 0, %s120
    $region4: #{tpu_custom_call.1} parent=1 // loop_header_branch
      %20 = sbr.rel (%p18) target = $region8
    $region5: #{tpu_custom_call.1} parent=1 // loop_body
      %s22 = ssub.s32 %s17, 1
      %s23 = ssub.s32 %s17, 2
      %s24 = sadd.s32 %s17, 1
      %s25 = ssub.s32 %s17, %s24
      %p26 = scmp.eq.s32.totalorder %s25, 0
      %s28 = sadd.s32 %s27, 1
      %s29 = scalar_select %p26, %s27, %s28
      %p32 = pneg %p26
      %p33 = scmp.eq.s32.totalorder %s17, 1
      %p34 = por %p32, %p33
      %p35 = scmp.ne.s32.totalorder %s27, %s30
      %p36 = scmp.eq.s32.totalorder %s17, 0
      %p37 = por %p35, %p36
      %p38 = scmp.ne.s32.totalorder %s27, %s30
      %p39 = scmp.eq.s32.totalorder %s22, 1
      %p40 = por %p38, %p39
      %p41 = scmp.ne.s32.totalorder %s30, %s31
      %p42 = scmp.eq.s32.totalorder %s22, 0
      %p43 = por %p41, %p42
      %p44 = scmp.ne.s32.totalorder %s30, %s31
      %p45 = scmp.eq.s32.totalorder %s23, 1
      %p46 = por %p44, %p45
      %p48 = scmp.ne.s32.totalorder %s31, %s47
      %p49 = scmp.eq.s32.totalorder %s23, 0
      %p50 = por %p48, %p49
      %s52 = sadd.s32 %s51, 1
      %p55 = scmp.eq.s32.totalorder %s17, 1
      %p56 = scmp.ne.s32.totalorder %s51, %s53
      %p57 = scmp.eq.s32.totalorder %s17, 0
      %p58 = por %p56, %p57
      %p59 = scmp.ne.s32.totalorder %s51, %s53
      %p60 = scmp.eq.s32.totalorder %s22, 1
      %p61 = por %p59, %p60
      %p62 = scmp.ne.s32.totalorder %s53, %s54
      %p63 = scmp.eq.s32.totalorder %s22, 0
      %p64 = por %p62, %p63
      %p65 = scmp.ne.s32.totalorder %s53, %s54
      %p66 = scmp.eq.s32.totalorder %s23, 1
      %p67 = por %p65, %p66
      %p69 = scmp.ne.s32.totalorder %s54, %s68
      %p70 = scmp.eq.s32.totalorder %s23, 0
      %p71 = por %p69, %p70
      %s73 = sadd.s32 %s72, 1
      %p76 = scmp.eq.s32.totalorder %s17, 1
      %p77 = scmp.ne.s32.totalorder %s72, %s74
      %p78 = scmp.eq.s32.totalorder %s17, 0
      %p79 = por %p77, %p78
      %p80 = scmp.ne.s32.totalorder %s72, %s74
      %p81 = scmp.eq.s32.totalorder %s22, 1
      %p82 = por %p80, %p81
      %p83 = scmp.ne.s32.totalorder %s74, %s75
      %p84 = scmp.eq.s32.totalorder %s22, 0
      %p85 = por %p83, %p84
      %p86 = scmp.ne.s32.totalorder %s74, %s75
      %p87 = scmp.eq.s32.totalorder %s23, 1
      %p88 = por %p86, %p87
      %p90 = scmp.ne.s32.totalorder %s75, %s89
      %p91 = scmp.eq.s32.totalorder %s23, 0
      %p92 = por %p90, %p91
      %s94 = sadd.s32 %s93, 1
      %p97 = scmp.eq.s32.totalorder %s17, 1
      %p98 = scmp.ne.s32.totalorder %s93, %s95
      %p99 = scmp.eq.s32.totalorder %s17, 0
      %p100 = por %p98, %p99
      %p101 = scmp.ne.s32.totalorder %s93, %s95
      %p102 = scmp.eq.s32.totalorder %s22, 1
      %p103 = por %p101, %p102
      %p104 = scmp.ne.s32.totalorder %s95, %s96
      %p105 = scmp.eq.s32.totalorder %s22, 0
      %p106 = por %p104, %p105
      %p107 = scmp.ne.s32.totalorder %s95, %s96
      %p108 = scmp.eq.s32.totalorder %s23, 1
      %p109 = por %p107, %p108
      %p111 = scmp.ne.s32.totalorder %s96, %s110
      %p112 = scmp.eq.s32.totalorder %s23, 0
      %p113 = por %p111, %p112
      %s114 = ssub.s32 %s17, %s24
      %p115 = scmp.eq.s32.totalorder %s114, 0
      %s117 = sadd.s32 %s116, 1
      %s118 = scalar_select %p115, %s116, %s117
      %p121 = pneg %p115
      %p122 = scmp.eq.s32.totalorder %s17, 1
      %p123 = por %p121, %p122
      %p124 = scmp.ne.s32.totalorder %s116, %s119
      %p125 = scmp.eq.s32.totalorder %s17, 0
      %p126 = por %p124, %p125
      %p127 = scmp.ne.s32.totalorder %s116, %s119
      %p128 = scmp.eq.s32.totalorder %s22, 1
      %p129 = por %p127, %p128
      %p130 = scmp.ne.s32.totalorder %s119, %s120
      %p131 = scmp.eq.s32.totalorder %s22, 0
      %p132 = por %p130, %p131
      %p133 = scmp.ne.s32.totalorder %s119, %s120
      %p134 = scmp.eq.s32.totalorder %s23, 1
      %p135 = por %p133, %p134
      %p137 = scmp.ne.s32.totalorder %s120, %s136
      %p138 = scmp.eq.s32.totalorder %s23, 0
      %p139 = por %p137, %p138
      %p140 = scmp.le.s32.totalorder 1, %s17
      %p141 = scmp.lt.s32.totalorder %s17, 3
      %p142 = pnand %p140, %p141
      %p143 = pneg %p142
      // Predicated region
      $region9: #{tpu_custom_call.1} parent=5 // pred_check
        _
      $region10: #{tpu_custom_call.1} parent=5 // pred_check_branch
        %145 = sbr.rel (%p142) target = $region12
      $region11: #{tpu_custom_call.1} parent=5 // pred_region
        %s146 = ssub.s32 %s17, 1
        // Predicated region
        $region13: #{tpu_custom_call.1} parent=11 // pred_check
          %p147 = pneg %p64
        $region14: #{tpu_custom_call.1} parent=11 // pred_check_branch
          %149 = sbr.rel (%p147) target = $region16
        $region15: #{tpu_custom_call.1} parent=11 // pred_region
          %151 = vsyncadd [#allocation6], 0
          %s152 = sshll.u32 %s1, 4
          %s153 = int_to_ptr.hbm [resolvable:$true] %s152
          %s154 = sshll.u32 [#allocation5], 4
          %s155 = int_to_ptr.vmem [resolvable:$true] %s154
          %160 = dma.hbm_to_vmem [thread:$0]  %s153, 2048, %s155, [#allocation6], 128, 128, 8
        $region16: #{tpu_custom_call.1} parent=11 // pred_fallthru
          _
        // Predicated region
        $region17: #{tpu_custom_call.1} parent=11 // pred_check
          %p161 = pneg %p85
        $region18: #{tpu_custom_call.1} parent=11 // pred_check_branch
          %163 = sbr.rel (%p161) target = $region20
        $region19: #{tpu_custom_call.1} parent=11 // pred_region
          _
        $region20: #{tpu_custom_call.1} parent=11 // pred_fallthru
          _
        // Predicated region
        $region21: #{tpu_custom_call.1} parent=11 // pred_check
          %p164 = pneg %p106
        $region22: #{tpu_custom_call.1} parent=11 // pred_check_branch
          %166 = sbr.rel (%p164) target = $region24
        $region23: #{tpu_custom_call.1} parent=11 // pred_region
          _
        $region24: #{tpu_custom_call.1} parent=11 // pred_fallthru
          _
      $region12: #{tpu_custom_call.1} parent=5 // pred_fallthru
        _
      %p167 = scmp.lt.s32.totalorder %s17, 2
      // Predicated region
      $region25: #{tpu_custom_call.1} parent=5 // pred_check
        %p168 = pneg %p167
      $region26: #{tpu_custom_call.1} parent=5 // pred_check_branch
        %170 = sbr.rel (%p168) target = $region28
      $region27: #{tpu_custom_call.1} parent=5 // pred_region
        // Predicated region
        $region29: #{tpu_custom_call.1} parent=27 // pred_check
          %p171 = pneg %p37
        $region30: #{tpu_custom_call.1} parent=27 // pred_check_branch
          %173 = sbr.rel (%p171) target = $region32
        $region31: #{tpu_custom_call.1} parent=27 // pred_region
          %s174 = sand.u32 %s27, 1
          %s175 = scalar_lea.sflag [#allocation3], %s174
          %s176 = sand.u32 %s27, 1
          %s177 = smul.addr %s176, 64
          %s178 = scalar_lea.vmem [#allocation2], %s177
          %s179 = smul.u32 8, %s17
          %181 = vsyncadd %s175, 0
          %s182 = smul.addr %s179, 8
          %s183 = scalar_lea.hbm %s0, %s182
          %s184 = sshll.u32 %s183, 4
          %s185 = int_to_ptr.hbm [resolvable:$true] %s184
          %s186 = sshll.u32 %s178, 4
          %s187 = int_to_ptr.vmem [resolvable:$true] %s186
          %192 = dma.hbm_to_vmem [thread:$0]  %s185, 1024, %s187, %s175, 128, 128, 8
        $region32: #{tpu_custom_call.1} parent=27 // pred_fallthru
          _
      $region28: #{tpu_custom_call.1} parent=5 // pred_fallthru
        _
      %p193 = scmp.le.s32.totalorder 1, %s17
      %p194 = scmp.lt.s32.totalorder %s17, 3
      %p195 = pnand %p193, %p194
      %p196 = pneg %p195
      // Predicated region
      $region33: #{tpu_custom_call.1} parent=5 // pred_check
        _
      $region34: #{tpu_custom_call.1} parent=5 // pred_check_branch
        %198 = sbr.rel (%p195) target = $region36
      $region35: #{tpu_custom_call.1} parent=5 // pred_region
        %s199 = ssub.s32 %s17, 1
        %s200 = sand.u32 %s30, 1
        %s201 = scalar_lea.sflag [#allocation3], %s200
        %s202 = sand.u32 %s30, 1
        %s203 = smul.addr %s202, 64
        %s204 = scalar_lea.vmem [#allocation2], %s203
        // Predicated region
        $region37: #{tpu_custom_call.1} parent=35 // pred_check
          %p205 = pneg %p43
        $region38: #{tpu_custom_call.1} parent=35 // pred_check_branch
          %207 = sbr.rel (%p205) target = $region40
        $region39: #{tpu_custom_call.1} parent=35 // pred_region
          %209 = dma.done %s201, 1024
        $region40: #{tpu_custom_call.1} parent=35 // pred_fallthru
          _
        // Predicated region
        $region41: #{tpu_custom_call.1} parent=35 // pred_check
          %p210 = pneg %p64
        $region42: #{tpu_custom_call.1} parent=35 // pred_check_branch
          %212 = sbr.rel (%p210) target = $region44
        $region43: #{tpu_custom_call.1} parent=35 // pred_region
          %214 = dma.done [#allocation6], 2048
        $region44: #{tpu_custom_call.1} parent=35 // pred_fallthru
          _
        %s215 = sand.u32 %s30, 1
        %s216 = scalar_lea.sflag [#allocation3], %s215
        %s217 = sand.u32 %s30, 1
        %s218 = smul.addr %s217, 64
        %s219 = scalar_lea.vmem [#allocation2], %s218
        %p220 = pneg %p43
        %p221 = pneg %p40
        %p222 = pneg %p64
        %p223 = pneg %p61
        %p224 = pneg %p85
        %p225 = pneg %p82
        %p226 = pneg %p106
        %p227 = pneg %p103
        %p228 = pneg %p132
        %p229 = pneg %p129
        %s230 = sand.u32 %s119, 1
        %s231 = scalar_lea.sflag [#allocation4], %s230
        %s232 = sand.u32 %s119, 1
        %s233 = smul.addr %s232, 64
        %s234 = scalar_lea.vmem [#allocation7], %s233
        %s235 = smul.u32 8, %s22
        %s236 = smul.u32 8, %s22
        %v237 = vld [vmem:[%s204] sm:$0xff]
        %v238 = vld [vmem:[%s204 + $0x8] sm:$0xff]
        %v239 = vld [vmem:[%s204 + $0x10] sm:$0xff]
        %v240 = vld [vmem:[%s204 + $0x18] sm:$0xff]
        %v241 = vld [vmem:[%s204 + $0x20] sm:$0xff]
        %v242 = vld [vmem:[%s204 + $0x28] sm:$0xff]
        %v243 = vld [vmem:[%s204 + $0x30] sm:$0xff]
        %v244 = vld [vmem:[%s204 + $0x38] sm:$0xff]
        %v245 = vld [vmem:[#allocation5] sm:$0xff]
        %v246 = vld [vmem:[#allocation5 + $0x8] sm:$0xff]
        %v247 = vld [vmem:[#allocation5 + $0x10] sm:$0xff]
        %v248 = vld [vmem:[#allocation5 + $0x18] sm:$0xff]
        %v249 = vld [vmem:[#allocation5 + $0x20] sm:$0xff]
        %v250 = vld [vmem:[#allocation5 + $0x28] sm:$0xff]
        %v251 = vld [vmem:[#allocation5 + $0x30] sm:$0xff]
        %v252 = vld [vmem:[#allocation5 + $0x38] sm:$0xff]
        %v253 = vld [vmem:[#allocation5 + $0x40] sm:$0xff]
        %v254 = vld [vmem:[#allocation5 + $0x48] sm:$0xff]
        %v255 = vld [vmem:[#allocation5 + $0x50] sm:$0xff]
        %v256 = vld [vmem:[#allocation5 + $0x58] sm:$0xff]
        %v257 = vld [vmem:[#allocation5 + $0x60] sm:$0xff]
        %v258 = vld [vmem:[#allocation5 + $0x68] sm:$0xff]
        %v259 = vld [vmem:[#allocation5 + $0x70] sm:$0xff]
        %v260 = vld [vmem:[#allocation5 + $0x78] sm:$0xff]
        %261 = vmatpush.msra.mxu0 %v260
        %262 = vmatpush.msra.mxu0 %v259
        %263 = vmatpush.msra.mxu0 %v258
        %264 = vmatpush.msra.mxu0 %v257
        %265 = vmatpush.msra.mxu0 %v256
        %266 = vmatpush.msra.mxu0 %v255
        %267 = vmatpush.msra.mxu0 %v254
        %268 = vmatpush.msra.mxu0 %v253
        %269 = vmatpush.msra.mxu0 %v252
        %270 = vmatpush.msra.mxu0 %v251
        %271 = vmatpush.msra.mxu0 %v250
        %272 = vmatpush.msra.mxu0 %v249
        %273 = vmatpush.msra.mxu0 %v248
        %274 = vmatpush.msra.mxu0 %v247
        %275 = vmatpush.msra.mxu0 %v246
        %276 = vmatpush.msra.mxu0 %v245
        %277 = vmatmul.f32.gmra.mxu0 %v237
        %v278 = vpop.f32.mrf.mxu0
        %v279 = vadd.f32 0.0, %v278
        %280 = vmatmul.f32.gmra.mxu0 %v238
        %v281 = vpop.f32.mrf.mxu0
        %v282 = vadd.f32 0.0, %v281
        %283 = vmatmul.f32.gmra.mxu0 %v239
        %v284 = vpop.f32.mrf.mxu0
        %v285 = vadd.f32 0.0, %v284
        %286 = vmatmul.f32.gmra.mxu0 %v240
        %v287 = vpop.f32.mrf.mxu0
        %v288 = vadd.f32 0.0, %v287
        %289 = vmatmul.f32.gmra.mxu0 %v241
        %v290 = vpop.f32.mrf.mxu0
        %v291 = vadd.f32 0.0, %v290
        %292 = vmatmul.f32.gmra.mxu0 %v242
        %v293 = vpop.f32.mrf.mxu0
        %v294 = vadd.f32 0.0, %v293
        %295 = vmatmul.f32.gmra.mxu0 %v243
        %v296 = vpop.f32.mrf.mxu0
        %v297 = vadd.f32 0.0, %v296
        %298 = vmatmul.f32.gmra.mxu0 %v244
        %v299 = vpop.f32.mrf.mxu0
        %v300 = vadd.f32 0.0, %v299
        %301 = vdwg.mxu0
        %v302 = vsub.f32 %v237, %v279
        %v303 = vsub.f32 %v238, %v282
        %v304 = vsub.f32 %v239, %v285
        %v305 = vsub.f32 %v240, %v288
        %v306 = vsub.f32 %v241, %v291
        %v307 = vsub.f32 %v242, %v294
        %v308 = vsub.f32 %v243, %v297
        %v309 = vsub.f32 %v244, %v300
        %v310 = vmul.f32 %v302, %v302
        %v311 = vmul.f32 %v303, %v303
        %v312 = vmul.f32 %v304, %v304
        %v313 = vmul.f32 %v305, %v305
        %v314 = vmul.f32 %v306, %v306
        %v315 = vmul.f32 %v307, %v307
        %v316 = vmul.f32 %v308, %v308
        %v317 = vmul.f32 %v309, %v309
        %318 = vmatpush.msra.mxu0 %v260
        %319 = vmatpush.msra.mxu0 %v259
        %320 = vmatpush.msra.mxu0 %v258
        %321 = vmatpush.msra.mxu0 %v257
        %322 = vmatpush.msra.mxu0 %v256
        %323 = vmatpush.msra.mxu0 %v255
        %324 = vmatpush.msra.mxu0 %v254
        %325 = vmatpush.msra.mxu0 %v253
        %326 = vmatpush.msra.mxu0 %v252
        %327 = vmatpush.msra.mxu0 %v251
        %328 = vmatpush.msra.mxu0 %v250
        %329 = vmatpush.msra.mxu0 %v249
        %330 = vmatpush.msra.mxu0 %v248
        %331 = vmatpush.msra.mxu0 %v247
        %332 = vmatpush.msra.mxu0 %v246
        %333 = vmatpush.msra.mxu0 %v245
        %334 = vmatmul.f32.gmra.mxu0 %v310
        %v335 = vpop.f32.mrf.mxu0
        %v336 = vadd.f32 1e-06, %v335
        %337 = vmatmul.f32.gmra.mxu0 %v311
        %v338 = vpop.f32.mrf.mxu0
        %v339 = vadd.f32 1e-06, %v338
        %340 = vmatmul.f32.gmra.mxu0 %v312
        %v341 = vpop.f32.mrf.mxu0
        %v342 = vadd.f32 1e-06, %v341
        %343 = vmatmul.f32.gmra.mxu0 %v313
        %v344 = vpop.f32.mrf.mxu0
        %v345 = vadd.f32 1e-06, %v344
        %346 = vmatmul.f32.gmra.mxu0 %v314
        %v347 = vpop.f32.mrf.mxu0
        %v348 = vadd.f32 1e-06, %v347
        %349 = vmatmul.f32.gmra.mxu0 %v315
        %v350 = vpop.f32.mrf.mxu0
        %v351 = vadd.f32 1e-06, %v350
        %352 = vmatmul.f32.gmra.mxu0 %v316
        %v353 = vpop.f32.mrf.mxu0
        %v354 = vadd.f32 1e-06, %v353
        %355 = vmatmul.f32.gmra.mxu0 %v317
        %v356 = vpop.f32.mrf.mxu0
        %v357 = vadd.f32 1e-06, %v356
        %358 = vdwg.mxu0
        %v359 = vrsqrt.pop %v336
        %v360 = vmul.f32 %v359, %v336
        %v361 = vmul.f32 %v360, %v359
        %v362 = vmul.f32 0.5, %v361
        %v363 = vsub.f32 1.5, %v362
        %v364 = vmul.f32 %v359, %v363
        %vm365 = vweird.f32 %v336
        %vm366 = vweird.f32 %v359
        %vm367 = vmor %vm365, %vm366
        %v368 = vsel %vm367, %v359, %v364
        %v369 = vrsqrt.pop %v339
        %v370 = vmul.f32 %v369, %v339
        %v371 = vmul.f32 %v370, %v369
        %v372 = vmul.f32 0.5, %v371
        %v373 = vsub.f32 1.5, %v372
        %v374 = vmul.f32 %v369, %v373
        %vm375 = vweird.f32 %v339
        %vm376 = vweird.f32 %v369
        %vm377 = vmor %vm375, %vm376
        %v378 = vsel %vm377, %v369, %v374
        %v379 = vrsqrt.pop %v342
        %v380 = vmul.f32 %v379, %v342
        %v381 = vmul.f32 %v380, %v379
        %v382 = vmul.f32 0.5, %v381
        %v383 = vsub.f32 1.5, %v382
        %v384 = vmul.f32 %v379, %v383
        %vm385 = vweird.f32 %v342
        %vm386 = vweird.f32 %v379
        %vm387 = vmor %vm385, %vm386
        %v388 = vsel %vm387, %v379, %v384
        %v389 = vrsqrt.pop %v345
        %v390 = vmul.f32 %v389, %v345
        %v391 = vmul.f32 %v390, %v389
        %v392 = vmul.f32 0.5, %v391
        %v393 = vsub.f32 1.5, %v392
        %v394 = vmul.f32 %v389, %v393
        %vm395 = vweird.f32 %v345
        %vm396 = vweird.f32 %v389
        %vm397 = vmor %vm395, %vm396
        %v398 = vsel %vm397, %v389, %v394
        %v399 = vrsqrt.pop %v348
        %v400 = vmul.f32 %v399, %v348
        %v401 = vmul.f32 %v400, %v399
        %v402 = vmul.f32 0.5, %v401
        %v403 = vsub.f32 1.5, %v402
        %v404 = vmul.f32 %v399, %v403
        %vm405 = vweird.f32 %v348
        %vm406 = vweird.f32 %v399
        %vm407 = vmor %vm405, %vm406
        %v408 = vsel %vm407, %v399, %v404
        %v409 = vrsqrt.pop %v351
        %v410 = vmul.f32 %v409, %v351
        %v411 = vmul.f32 %v410, %v409
        %v412 = vmul.f32 0.5, %v411
        %v413 = vsub.f32 1.5, %v412
        %v414 = vmul.f32 %v409, %v413
        %vm415 = vweird.f32 %v351
        %vm416 = vweird.f32 %v409
        %vm417 = vmor %vm415, %vm416
        %v418 = vsel %vm417, %v409, %v414
        %v419 = vrsqrt.pop %v354
        %v420 = vmul.f32 %v419, %v354
        %v421 = vmul.f32 %v420, %v419
        %v422 = vmul.f32 0.5, %v421
        %v423 = vsub.f32 1.5, %v422
        %v424 = vmul.f32 %v419, %v423
        %vm425 = vweird.f32 %v354
        %vm426 = vweird.f32 %v419
        %vm427 = vmor %vm425, %vm426
        %v428 = vsel %vm427, %v419, %v424
        %v429 = vrsqrt.pop %v357
        %v430 = vmul.f32 %v429, %v357
        %v431 = vmul.f32 %v430, %v429
        %v432 = vmul.f32 0.5, %v431
        %v433 = vsub.f32 1.5, %v432
        %v434 = vmul.f32 %v429, %v433
        %vm435 = vweird.f32 %v357
        %vm436 = vweird.f32 %v429
        %vm437 = vmor %vm435, %vm436
        %v438 = vsel %vm437, %v429, %v434
        %v439 = vmul.f32 %v302, %v368
        %v440 = vmul.f32 %v303, %v378
        %v441 = vmul.f32 %v304, %v388
        %v442 = vmul.f32 %v305, %v398
        %v443 = vmul.f32 %v306, %v408
        %v444 = vmul.f32 %v307, %v418
        %v445 = vmul.f32 %v308, %v428
        %v446 = vmul.f32 %v309, %v438
        %v447 = vld [vmem:[%s2] sm:$0x1]
        %v449 = vperm.slane %v447, 0
        %v451 = vmul.f32 %v439, %v449
        %v452 = vmul.f32 %v440, %v449
        %v453 = vmul.f32 %v441, %v449
        %v454 = vmul.f32 %v442, %v449
        %v455 = vmul.f32 %v443, %v449
        %v456 = vmul.f32 %v444, %v449
        %v457 = vmul.f32 %v445, %v449
        %v458 = vmul.f32 %v446, %v449
        %v459 = vld [vmem:[%s3] sm:$0x1]
        %v461 = vperm.slane %v459, 0
        %v463 = vadd.f32 %v451, %v461
        %v464 = vadd.f32 %v452, %v461
        %v465 = vadd.f32 %v453, %v461
        %v466 = vadd.f32 %v454, %v461
        %v467 = vadd.f32 %v455, %v461
        %v468 = vadd.f32 %v456, %v461
        %v469 = vadd.f32 %v457, %v461
        %v470 = vadd.f32 %v458, %v461
        %471 = vst [vmem:[%s234] sm:$0xff] %v463
        %472 = vst [vmem:[%s234 + $0x8] sm:$0xff] %v464
        %473 = vst [vmem:[%s234 + $0x10] sm:$0xff] %v465
        %474 = vst [vmem:[%s234 + $0x18] sm:$0xff] %v466
        %475 = vst [vmem:[%s234 + $0x20] sm:$0xff] %v467
        %476 = vst [vmem:[%s234 + $0x28] sm:$0xff] %v468
        %477 = vst [vmem:[%s234 + $0x30] sm:$0xff] %v469
        %478 = vst [vmem:[%s234 + $0x38] sm:$0xff] %v470
        %s479 = sand.u32 %s119, 1
        %s480 = scalar_lea.sflag [#allocation4], %s479
        %s481 = sand.u32 %s119, 1
        %s482 = smul.addr %s481, 64
        %s483 = scalar_lea.vmem [#allocation7], %s482
        // Predicated region
        $region45: #{tpu_custom_call.1} parent=35 // pred_check
          %p484 = pneg %p129
        $region46: #{tpu_custom_call.1} parent=35 // pred_check_branch
          %486 = sbr.rel (%p484) target = $region48
        $region47: #{tpu_custom_call.1} parent=35 // pred_region
          %s487 = smul.u32 8, %s22
          %489 = vsyncadd %s480, 0
          %s490 = smul.addr %s487, 8
          %s491 = scalar_lea.hbm %s4, %s490
          %s492 = sshll.u32 %s483, 4
          %s493 = int_to_ptr.vmem [resolvable:$true] %s492
          %s494 = sshll.u32 %s491, 4
          %s495 = int_to_ptr.hbm [resolvable:$true] %s494
          %500 = dma.vmem_to_hbm [thread:$0]  %s493, 1024, %s495, %s480, 128, 128, 8
        $region48: #{tpu_custom_call.1} parent=35 // pred_fallthru
          _
      $region36: #{tpu_custom_call.1} parent=5 // pred_fallthru
        _
      %p501 = scmp.le.s32.totalorder 2, %s17
      // Predicated region
      $region49: #{tpu_custom_call.1} parent=5 // pred_check
        %p502 = pneg %p501
      $region50: #{tpu_custom_call.1} parent=5 // pred_check_branch
        %504 = sbr.rel (%p502) target = $region52
      $region51: #{tpu_custom_call.1} parent=5 // pred_region
        %s505 = ssub.s32 %s17, 2
        // Predicated region
        $region53: #{tpu_custom_call.1} parent=51 // pred_check
          %p506 = pneg %p135
        $region54: #{tpu_custom_call.1} parent=51 // pred_check_branch
          %508 = sbr.rel (%p506) target = $region56
        $region55: #{tpu_custom_call.1} parent=51 // pred_region
          %s509 = sand.u32 %s120, 1
          %s510 = scalar_lea.sflag [#allocation4], %s509
          %s511 = sand.u32 %s120, 1
          %s512 = smul.addr %s511, 64
          %s513 = scalar_lea.vmem [#allocation7], %s512
          %515 = dma.done %s510, 1024
        $region56: #{tpu_custom_call.1} parent=51 // pred_fallthru
          _
      $region52: #{tpu_custom_call.1} parent=5 // pred_fallthru
        _
    $region6: #{tpu_custom_call.1} parent=1 // loop_footer
      %s21 = sadd.s32 1, %s17
    $region7: #{tpu_custom_call.1} parent=1 // loop_footer_branch
      %16 = sbr.rel target = $region3
    $region8: #{tpu_custom_call.1} parent=1 // loop_exit
      _
    %516 = vsyncpa [#allocation3], 1
    %s517 = scalar_lea.sflag [#allocation3], 1
    %518 = vsyncpa %s517, 1
    %519 = vsyncpa [#allocation6], 1
    %520 = vsyncpa [#allocation4], 1
    %s521 = scalar_lea.sflag [#allocation4], 1
    %522 = vsyncpa %s521, 1

</llo_original>
